<compile_context>
chip_gen: v7x
topology: tpu7x:2x2x1
jax: 0.10.0
libtpu: 0.0.40
codegen_flags: <defaults>
</compile_context>

<pallas_src>
import functools
import math

import jax
import jax.numpy as jnp
from jax import lax
from jax.experimental import pallas as pl
from jax.experimental.pallas import tpu as pltpu
import numpy as np

_VMEM_LIMIT_BYTES = 48 * 1024 * 1024  # below v7x's 64 MiB physical, above default scoped limits


def _pick_tile(dim, candidates):
    for t in candidates:
        if dim >= t and dim % t == 0:
            return t
    return dim  # small / non-divisible -> full extent (always satisfies block constraints)


# ---------------------------------------------------------------------------
# Linear (nn.Linear, bias=False):  y = x @ W^T   — M/N/K tiled, f32 accumulator
# ---------------------------------------------------------------------------
def _linear_kernel(x_ref, wt_ref, o_ref, acc_ref):
    @pl.when(pl.program_id(2) == 0)
    def _():
        acc_ref[...] = jnp.zeros(acc_ref.shape, acc_ref.dtype)

    acc_ref[...] += jnp.dot(x_ref[...], wt_ref[...],
                            preferred_element_type=jnp.float32)

    @pl.when(pl.program_id(2) == pl.num_programs(2) - 1)
    def _():
        o_ref[...] = acc_ref[...].astype(o_ref.dtype)


def linear(x, w):
    """x: (M, K), w: (N, K) -> (M, N)  (== x @ w.T)."""
    m, k = x.shape
    n, _ = w.shape
    wt = w.T  # one-time (K, N) layout: kernel contracts x's last dim with wt's first dim
    tm = _pick_tile(m, (512, 256, 128))
    tn = _pick_tile(n, (512, 256, 128))
    tk = _pick_tile(k, (1024, 512, 256))
    return pl.pallas_call(
        _linear_kernel,
        out_shape=jax.ShapeDtypeStruct((m, n), x.dtype),
        grid_spec=pltpu.PrefetchScalarGridSpec(
            num_scalar_prefetch=0,
            grid=(m // tm, n // tn, k // tk),
            in_specs=[
                pl.BlockSpec((tm, tk), lambda i, j, kk: (i, kk)),
                pl.BlockSpec((tk, tn), lambda i, j, kk: (kk, j)),
            ],
            out_specs=pl.BlockSpec((tm, tn), lambda i, j, kk: (i, j)),
            scratch_shapes=[pltpu.VMEM((tm, tn), jnp.float32)],
        ),
        compiler_params=pltpu.CompilerParams(
            dimension_semantics=("parallel", "parallel", "arbitrary"),
            vmem_limit_bytes=_VMEM_LIMIT_BYTES,
        ),
    )(x, wt)


# ---------------------------------------------------------------------------
# Flash-style GQA attention kernel.
#   q_r: (B, KVH, G, S, hd)   k_r/v_r: (B, KVH, S, hd)   out: (B, KVH, G, S, hd)
#   grid = (B, KVH, n_q_blocks, n_kv_blocks); kv-block axis last ("arbitrary").
# ---------------------------------------------------------------------------
def _flash_gqa_kernel(slopes_ref, q_ref, k_ref, v_ref, o_ref,
                      m_sc, l_sc, acc_sc, *,
                      group, q_tile, kv_tile, window_size, scale):
    kvh = pl.program_id(1)
    qi = pl.program_id(2)
    ki = pl.program_id(3)

    @pl.when(ki == 0)
    def _():
        m_sc[...] = jnp.full(m_sc.shape, -jnp.inf, m_sc.dtype)
        l_sc[...] = jnp.zeros(l_sc.shape, l_sc.dtype)
        acc_sc[...] = jnp.zeros(acc_sc.shape, acc_sc.dtype)

    q_start = qi * q_tile
    k_start = ki * kv_tile

    # Tile skipping: causal (tile not entirely above the diagonal) and, if a sliding
    # window is set, tile not entirely before the window of the first query row.
    live = k_start <= q_start + (q_tile - 1)
    if window_size >= 0:
        live = jnp.logical_and(live, k_start + (kv_tile - 1) >= q_start - window_size)

    @pl.when(live)
    def _():
        head_dim = q_ref.shape[-1]
        q = q_ref[...].reshape(group * q_tile, head_dim)     # group stacked into M
        k = k_ref[...] * scale                               # scale folded once per tile
        v = v_ref[...]

        # one group-batched QK^T matmul per kv-head
        s = lax.dot_general(q, k, (((1,), (1,)), ((), ())),
                            preferred_element_type=jnp.float32)      # (G*tq, tk)
        s = s.reshape(group, q_tile, kv_tile)

        # tile-local positions, ALiBi bias and causal / sliding-window mask
        lq = lax.broadcasted_iota(jnp.int32, (q_tile, kv_tile), 0)
        lk = lax.broadcasted_iota(jnp.int32, (q_tile, kv_tile), 1)
        delta = (q_start + lq) - (k_start + lk)                      # q_pos - k_pos
        mask = delta >= 0
        if window_size >= 0:
            mask = jnp.logical_and(mask, delta <= window_size)
        deltaf = delta.astype(jnp.float32)
        bias = jnp.concatenate(
            [(slopes_ref[kvh * group + g] * deltaf)[None] for g in range(group)],
            axis=0)                                                  # (G, tq, tk)
        s = jnp.where(mask[None], s - bias, -1e30)

        # online softmax update (all stats in f32); masked-only rows self-correct
        m_prev = m_sc[...]
        m_new = jnp.maximum(m_prev, jnp.max(s, axis=-1, keepdims=True))
        alpha = jnp.exp(m_prev - m_new)
        p = jnp.exp(s - m_new)
        l_sc[...] = alpha * l_sc[...] + jnp.sum(p, axis=-1, keepdims=True)
        pv = lax.dot_general(
            p.reshape(group * q_tile, kv_tile).astype(v.dtype), v,
            (((1,), (0,)), ((), ())), preferred_element_type=jnp.float32)
        acc_sc[...] = alpha * acc_sc[...] + pv.reshape(group, q_tile, head_dim)
        m_sc[...] = m_new

    @pl.when(ki == pl.num_programs(3) - 1)
    def _():
        # normalize once after the PV accumulation: O(tq*hd) mults, not O(tq*tk)
        o_ref[...] = (acc_sc[...] * pl.reciprocal(l_sc[...], approx=True)
                      ).astype(o_ref.dtype)


def gqa_attention(q_r, k_r, v_r, slopes, window_size):
    b, kv_heads, group, s, head_dim = q_r.shape
    scale = 1.0 / math.sqrt(head_dim)
    q_tile = _pick_tile(s, (256, 128))
    kv_tile = _pick_tile(s, (256, 128))
    kernel = functools.partial(
        _flash_gqa_kernel, group=group, q_tile=q_tile, kv_tile=kv_tile,
        window_size=window_size, scale=scale)
    return pl.pallas_call(
        kernel,
        out_shape=jax.ShapeDtypeStruct((b, kv_heads, group, s, head_dim), q_r.dtype),
        grid_spec=pltpu.PrefetchScalarGridSpec(
            num_scalar_prefetch=0,
            grid=(b, kv_heads, s // q_tile, s // kv_tile),
            in_specs=[
                pl.BlockSpec(memory_space=pltpu.MemorySpace.SMEM),      # ALiBi slopes
                pl.BlockSpec((None, None, group, q_tile, head_dim),
                             lambda bi, h, qi, ki: (bi, h, 0, qi, 0)),  # Q (group-major)
                pl.BlockSpec((None, None, kv_tile, head_dim),
                             lambda bi, h, qi, ki: (bi, h, ki, 0)),     # K tile
                pl.BlockSpec((None, None, kv_tile, head_dim),
                             lambda bi, h, qi, ki: (bi, h, ki, 0)),     # V tile
            ],
            out_specs=pl.BlockSpec((None, None, group, q_tile, head_dim),
                                   lambda bi, h, qi, ki: (bi, h, 0, qi, 0)),
            scratch_shapes=[
                pltpu.VMEM((group, q_tile, 1), jnp.float32),            # running max
                pltpu.VMEM((group, q_tile, 1), jnp.float32),            # running denom
                pltpu.VMEM((group, q_tile, head_dim), jnp.float32),     # accumulator
            ],
        ),
        compiler_params=pltpu.CompilerParams(
            dimension_semantics=("parallel", "parallel", "parallel", "arbitrary"),
            vmem_limit_bytes=_VMEM_LIMIT_BYTES,
        ),
    )(slopes, q_r, k_r, v_r)


# ---------------------------------------------------------------------------
# GQA module forward (wrapper around the Pallas kernels)
# ---------------------------------------------------------------------------
def gqa_forward(x, w_qkv, w_proj, slopes, q_heads, kv_heads, window_size):
    b, s, dim = x.shape
    head_dim = dim // q_heads
    group = q_heads // kv_heads
    total = q_heads + 2 * kv_heads

    qkv = linear(x.reshape(b * s, dim), w_qkv)                     # (B*S, total*hd)
    qkv4 = qkv.reshape(b, s, total, head_dim)
    q = qkv4[:, :, :q_heads]                                       # (B,S,QH,hd)
    k = qkv4[:, :, q_heads:q_heads + kv_heads]                     # (B,S,KV,hd)
    v = qkv4[:, :, q_heads + kv_heads:]

    # head-major layouts so the kernel can group-batch q-heads (O(B*S*dim) transposes)
    q_r = q.transpose(0, 2, 1, 3).reshape(b, kv_heads, group, s, head_dim)
    k_r = k.transpose(0, 2, 1, 3)                                  # (B,KV,S,hd)
    v_r = v.transpose(0, 2, 1, 3)

    att = gqa_attention(q_r, k_r, v_r, slopes, window_size)        # (B,KV,G,S,hd)
    att = att.transpose(0, 3, 1, 2, 4).reshape(b * s, q_heads * head_dim)

    out = linear(att, w_proj).reshape(b, s, dim)

    # inference-mode KV cache (module is "not self.training"); same slicing as PyTorch
    if window_size == -1:
        next_kv_cache = (k, v)
    else:
        next_kv_cache = (k[:, -window_size:], v[:, -window_size:])
    return out, next_kv_cache


# ---------------------------------------------------------------------------
# Pure-JAX reference (for correctness check)
# ---------------------------------------------------------------------------
def gqa_reference(x, w_qkv, w_proj, slopes, q_heads, kv_heads, window_size):
    b, s, dim = x.shape
    head_dim = dim // q_heads
    qkv = (x.reshape(b * s, dim) @ w_qkv.T).reshape(b, s, q_heads + 2 * kv_heads, head_dim)
    q = qkv[:, :, :q_heads]
    k = qkv[:, :, q_heads:q_heads + kv_heads]
    v = qkv[:, :, q_heads + kv_heads:]
    group = q_heads // kv_heads
    k_g = jnp.repeat(k, group, axis=2)
    v_g = jnp.repeat(v, group, axis=2)
    scale = 1.0 / math.sqrt(head_dim)
    scores = jnp.einsum("bihd,bjhd->bhij", q, k_g) * scale
    qi = jnp.arange(s)[:, None]
    kj = jnp.arange(s)[None, :]
    bias = -slopes[None, :, None, None] * (qi - kj).astype(jnp.float32)[None, None]
    scores = scores + bias
    mask = kj <= qi
    if window_size >= 0:
        mask = mask & ((qi - kj) <= window_size)
    scores = jnp.where(mask[None, None], scores, -1e30)
    p = jax.nn.softmax(scores, axis=-1)
    att = jnp.einsum("bhij,bjhd->bihd", p, v_g).reshape(b, s, q_heads * head_dim)
    out = (att.reshape(b * s, -1) @ w_proj.T).reshape(b, s, dim)
    return out


# ---------------------------------------------------------------------------
if __name__ == "__main__":
    # Small shapes consistent with the module: dim=32, q_heads=4, kv_heads=2,
    # head_dim=8, window_size=4, batch=2, seq=8.
    B, S, DIM = 2, 8, 32
    Q_HEADS, KV_HEADS, WINDOW = 4, 2, 4
    HEAD_DIM = DIM // Q_HEADS

    key = jax.random.PRNGKey(0)
    kx, kw1, kw2 = jax.random.split(key, 3)

    x = jax.random.normal(kx, (B, S, DIM), dtype=jnp.float32)
    w_qkv = 0.02 * jax.random.normal(
        kw1, ((Q_HEADS + 2 * KV_HEADS) * HEAD_DIM, DIM), dtype=jnp.float32)
    w_proj = 0.02 * jax.random.normal(
        kw2, (DIM, Q_HEADS * HEAD_DIM), dtype=jnp.float32)

    # ALiBi slopes exactly as in the module: exp2(-((h+1) * 8 / q_heads))
    slopes = jnp.exp2(
        -((jnp.arange(Q_HEADS, dtype=jnp.float32) + 1.0) * 8.0 / Q_HEADS))

    out, (k_cache, v_cache) = gqa_forward(
        x, w_qkv, w_proj, slopes, Q_HEADS, KV_HEADS, WINDOW)
    out = jax.block_until_ready(out)
    jax.block_until_ready((k_cache, v_cache))

    ref = gqa_reference(x, w_qkv, w_proj, slopes, Q_HEADS, KV_HEADS, WINDOW)
    # tolerance loosened slightly for the approx (EUP) reciprocal in the softmax
    np.testing.assert_allclose(np.asarray(out), np.asarray(ref), rtol=2e-3, atol=1e-3)
    assert k_cache.shape == (B, WINDOW, KV_HEADS, HEAD_DIM)
    assert v_cache.shape == (B, WINDOW, KV_HEADS, HEAD_DIM)

    print("KERNEL_OK")
</pallas_src>

<mosaic_0001>
module attributes {stable_mosaic.version = 11 : i64} {
  func.func @_linear_kernel(%arg0: i32, %arg1: i32, %arg2: i32, %arg3: memref<16x32xf32, #tpu.memory_space<vmem>>, %arg4: memref<32x64xf32, #tpu.memory_space<vmem>>, %arg5: memref<16x64xf32, #tpu.memory_space<vmem>>, %arg6: memref<16x64xf32, #tpu.memory_space<vmem>>) attributes {dimension_semantics = [#tpu.dimension_semantics<parallel>, #tpu.dimension_semantics<parallel>, #tpu.dimension_semantics<arbitrary>], iteration_bounds = array<i64: 1, 1, 1>, scalar_prefetch = 0 : i64, scratch_operands = 1 : i64, tpu.core_type = #tpu.core_type<tc>, window_params = [{transform_indices = @transform_0, window_bounds = array<i64: 16, 32>}, {transform_indices = @transform_1, window_bounds = array<i64: 32, 64>}, {transform_indices = @transform_2, window_bounds = array<i64: 16, 64>}]} {
    %c0_i32 = arith.constant 0 : i32
    %0 = arith.cmpi eq, %arg2, %c0_i32 : i32
    %1 = arith.extui %0 : i1 to i32
    %c0_i32_0 = arith.constant 0 : i32
    %2 = arith.cmpi ne, %1, %c0_i32_0 : i32
    scf.if %2 {
      %cst_10 = arith.constant 0.000000e+00 : f32
      %12 = vector.broadcast %cst_10 : f32 to vector<16x64xf32>
      %c0_11 = arith.constant 0 : index
      %c0_12 = arith.constant 0 : index
      %13 = vector.load %arg6[%c0_11, %c0_12] : memref<16x64xf32, #tpu.memory_space<vmem>>, vector<16x64xf32>
      tpu.vector_store %arg6[%c0_11, %c0_12], %12 {strides = array<i32>} : memref<16x64xf32, #tpu.memory_space<vmem>>, vector<16x64xf32>,
    } else {
    }
    %c0 = arith.constant 0 : index
    %c0_1 = arith.constant 0 : index
    %3 = vector.load %arg6[%c0, %c0_1] : memref<16x64xf32, #tpu.memory_space<vmem>>, vector<16x64xf32>
    %c0_2 = arith.constant 0 : index
    %c0_3 = arith.constant 0 : index
    %4 = vector.load %arg3[%c0_2, %c0_3] : memref<16x32xf32, #tpu.memory_space<vmem>>, vector<16x32xf32>
    %c0_4 = arith.constant 0 : index
    %c0_5 = arith.constant 0 : index
    %5 = vector.load %arg4[%c0_4, %c0_5] : memref<32x64xf32, #tpu.memory_space<vmem>>, vector<32x64xf32>
    %cst = arith.constant dense<0.000000e+00> : vector<16x64xf32>
    %6 = tpu.matmul %4, %5, %cst {dimension_numbers = #tpu.dot_dimension_numbers<[1], [0], [0], [1], [0, 0, 1, 1], [], []>} : vector<16x32xf32>, vector<32x64xf32>, vector<16x64xf32> -> vector<16x64xf32>
    %7 = arith.addf %3, %6 : vector<16x64xf32>
    %c0_6 = arith.constant 0 : index
    %c0_7 = arith.constant 0 : index
    %8 = vector.load %arg6[%c0_6, %c0_7] : memref<16x64xf32, #tpu.memory_space<vmem>>, vector<16x64xf32>
    tpu.vector_store %arg6[%c0_6, %c0_7], %7 {strides = array<i32>} : memref<16x64xf32, #tpu.memory_space<vmem>>, vector<16x64xf32>,
    %c0_i32_8 = arith.constant 0 : i32
    %9 = arith.cmpi eq, %arg2, %c0_i32_8 : i32
    %10 = arith.extui %9 : i1 to i32
    %c0_i32_9 = arith.constant 0 : i32
    %11 = arith.cmpi ne, %10, %c0_i32_9 : i32
    scf.if %11 {
      %c0_10 = arith.constant 0 : index
      %c0_11 = arith.constant 0 : index
      %12 = vector.load %arg6[%c0_10, %c0_11] : memref<16x64xf32, #tpu.memory_space<vmem>>, vector<16x64xf32>
      %c0_12 = arith.constant 0 : index
      %c0_13 = arith.constant 0 : index
      %13 = vector.load %arg5[%c0_12, %c0_13] : memref<16x64xf32, #tpu.memory_space<vmem>>, vector<16x64xf32>
      tpu.vector_store %arg5[%c0_12, %c0_13], %12 {strides = array<i32>} : memref<16x64xf32, #tpu.memory_space<vmem>>, vector<16x64xf32>,
    } else {
    }
    return
  }
  func.func @transform_0(%arg0: i32, %arg1: i32, %arg2: i32) -> (i32, i32) {
    %c0_i32 = arith.constant 0 : i32
    return %arg0, %arg2 : i32, i32
  }
  func.func @transform_1(%arg0: i32, %arg1: i32, %arg2: i32) -> (i32, i32) {
    %c0_i32 = arith.constant 0 : i32
    return %arg2, %arg1 : i32, i32
  }
  func.func @transform_2(%arg0: i32, %arg1: i32, %arg2: i32) -> (i32, i32) {
    %c0_i32 = arith.constant 0 : i32
    return %arg0, %arg1 : i32, i32
  }
}

</mosaic_0001>

<llo_original>
// kernel: tpu_custom_call.1
$region0: #{tpu_custom_call.1}
  #allocation0 [shape = 'u32[]', space=smem, size = 0x4, offset = 0x4, fixed_abs, tag = 'smem constant byte address 0x4 - core index']
  #allocation1 [shape = 'u32[144,128]{1,0:T(1,128)}', space=vmem, size = 0x12000, scoped, tag = 'internal scratch']
  #allocation2 [shape = 'f32[16,64]{1,0:T(8,128)}', space=vmem, size = 0x2000, scoped, tag = 'scratch operand']
  %s0 = inlined_call_operand.hbm [shape: f32[16,32], index: 0, kind: input, shape index: {}]
  %s1 = inlined_call_operand.hbm [shape: f32[32,64], index: 1, kind: input, shape index: {}]
  %s2 = inlined_call_operand.hbm [shape: f32[16,64], index: 2, kind: output, shape index: {}]
  %s3 = sld [smem:[#allocation0]]
  $region34: #{tpu_custom_call.1} parent=0
    _
  %s5 = ssub.s32 1, %s3
  %s6 = scalar_select 0, %s5, %s3
  $region1: #{tpu_custom_call.1} parent=0
    #allocation3 [shape = 'u8[8192]{0}', space=vmem, size = 0x2000, scoped, tag = 'input window, operand 0, single buffered']
    #allocation4 [shape = 's32[1]{0}', space=sflag, size = 0x4, scoped, tag = 'scoped memory for tpu_custom_call.1']
    #allocation5 [shape = 's32[1]{0}', space=sflag, size = 0x4, scoped, tag = 'scoped memory for tpu_custom_call.1']
    #allocation6 [shape = 'u8[16384]{0}', space=vmem, size = 0x4000, scoped, tag = 'input window, operand 1, single buffered']
    #allocation7 [shape = 's32[1]{0}', space=sflag, size = 0x4, scoped, tag = 'scoped memory for tpu_custom_call.1']
    #allocation8 [shape = 'u8[8192]{0}', space=vmem, size = 0x2000, scoped, tag = 'output window, operand 0, single buffered']
    %7 = vsyncpa [#allocation4], 0
    %8 = vsyncpa [#allocation7], 0
    %9 = vsyncpa [#allocation5], 0
    // Predicated region
    $region2: #{tpu_custom_call.1} parent=1 // pred_check
      _
    $region3: #{tpu_custom_call.1} parent=1 // pred_check_branch
      %11 = sbr.rel (0) target = $region5
    $region4: #{tpu_custom_call.1} parent=1 // pred_region
      %s13 = ssub.s32 256, 256
      %14 = vsyncadd [#allocation4], %s13
      %s15 = sshll.u32 [#allocation3], 4
      %s16 = int_to_ptr.vmem [resolvable:$true] %s15
      %21 = dma.hbm_to_vmem [thread:$0]  %s0, 256, %s16, [#allocation4], 128, 128, 8
    $region5: #{tpu_custom_call.1} parent=1 // pred_fallthru
      _
    // Predicated region
    $region6: #{tpu_custom_call.1} parent=1 // pred_check
      _
    $region7: #{tpu_custom_call.1} parent=1 // pred_check_branch
      %23 = sbr.rel (0) target = $region9
    $region8: #{tpu_custom_call.1} parent=1 // pred_region
      %s25 = ssub.s32 512, 512
      %26 = vsyncadd [#allocation7], %s25
      %s27 = sshll.u32 [#allocation6], 4
      %s28 = int_to_ptr.vmem [resolvable:$true] %s27
      %33 = dma.hbm_to_vmem [thread:$0]  %s1, 512, %s28, [#allocation7], 128, 128, 8
    $region9: #{tpu_custom_call.1} parent=1 // pred_fallthru
      _
    // Predicated region
    $region10: #{tpu_custom_call.1} parent=1 // pred_check
      _
    $region11: #{tpu_custom_call.1} parent=1 // pred_check_branch
      %35 = sbr.rel (0) target = $region13
    $region12: #{tpu_custom_call.1} parent=1 // pred_region
      %36 = dma.done [#allocation4], 256
    $region13: #{tpu_custom_call.1} parent=1 // pred_fallthru
      _
    // Predicated region
    $region14: #{tpu_custom_call.1} parent=1 // pred_check
      _
    $region15: #{tpu_custom_call.1} parent=1 // pred_check_branch
      %38 = sbr.rel (0) target = $region17
    $region16: #{tpu_custom_call.1} parent=1 // pred_region
      %39 = dma.done [#allocation7], 512
    $region17: #{tpu_custom_call.1} parent=1 // pred_fallthru
      _
    %p40 = scmp.eq.s32.totalorder 0, 0
    // Predicated region
    $region18: #{tpu_custom_call.1} parent=1 // pred_check
      %p41 = pneg %p40
    $region19: #{tpu_custom_call.1} parent=1 // pred_check_branch
      %43 = sbr.rel (%p41) target = $region21
    $region20: #{tpu_custom_call.1} parent=1 // pred_region
      %vm44 = vcmask 523264
      %45 = vst.msk [vmem:[#allocation2] sm:$0xff] %vm44, 0.0
      %46 = vst.msk [vmem:[#allocation2 + $0x8] sm:$0xff] %vm44, 0.0
    $region21: #{tpu_custom_call.1} parent=1 // pred_fallthru
      _
    %v47 = vld [vmem:[#allocation2] sm:$0xff]
    %v48 = vld [vmem:[#allocation2 + $0x8] sm:$0xff]
    %v49 = vld [vmem:[#allocation3] sm:$0xff]
    %v50 = vld [vmem:[#allocation3 + $0x8] sm:$0xff]
    %v51 = vld [vmem:[#allocation6] sm:$0xff]
    %v52 = vld [vmem:[#allocation6 + $0x8] sm:$0xff]
    %v53 = vld [vmem:[#allocation6 + $0x10] sm:$0xff]
    %v54 = vld [vmem:[#allocation6 + $0x18] sm:$0xff]
    %vm55 = vcmask 261120
    %v57 = vsel %vm55, %v49, 0
    %v60 = vsel %vm55, %v50, 0
    %62 = vmatprep.subr.mxu0 0.0
    %63 = vmatpush1.msra.mxu0 %v51
    %64 = vmatprep.subr.mxu0 0.0
    %65 = vmatpush1.msra.mxu0 %v52
    %66 = vmatprep.subr.mxu0 0.0
    %67 = vmatpush1.msra.mxu0 %v53
    %68 = vmatprep.subr.mxu0 0.0
    %69 = vmatpush1.msra.mxu0 %v54
    %70 = vmatprep.subr.mxu0 0.0
    %71 = vmatpush1.msra.mxu0 0.0
    %72 = vmatprep.subr.mxu0 0.0
    %73 = vmatpush1.msra.mxu0 0.0
    %74 = vmatprep.subr.mxu0 0.0
    %75 = vmatpush1.msra.mxu0 0.0
    %76 = vmatprep.subr.mxu0 0.0
    %77 = vmatpush1.msra.mxu0 0.0
    %78 = vmatprep.subr.mxu0 0.0
    %79 = vmatpush1.msra.mxu0 0.0
    %80 = vmatprep.subr.mxu0 0.0
    %81 = vmatpush1.msra.mxu0 0.0
    %82 = vmatprep.subr.mxu0 0.0
    %83 = vmatpush1.msra.mxu0 0.0
    %84 = vmatprep.subr.mxu0 0.0
    %85 = vmatpush1.msra.mxu0 0.0
    %86 = vmatprep.subr.mxu0 0.0
    %87 = vmatpush1.msra.mxu0 0.0
    %88 = vmatprep.subr.mxu0 0.0
    %89 = vmatpush1.msra.mxu0 0.0
    %90 = vmatprep.subr.mxu0 0.0
    %91 = vmatpush1.msra.mxu0 0.0
    %92 = vmatprep.subr.mxu0 0.0
    %93 = vmatpush1.msra.mxu0 0.0
    %94 = vmatprep.subr.mxu0 0.0
    %95 = vmatpush1.msra.mxu0 0.0
    %96 = vmatprep.subr.mxu0 0.0
    %97 = vmatpush1.msra.mxu0 0.0
    %98 = vmatprep.subr.mxu0 0.0
    %99 = vmatpush1.msra.mxu0 0.0
    %100 = vmatprep.subr.mxu0 0.0
    %101 = vmatpush1.msra.mxu0 0.0
    %102 = vmatprep.subr.mxu0 0.0
    %103 = vmatpush1.msra.mxu0 0.0
    %104 = vmatprep.subr.mxu0 0.0
    %105 = vmatpush1.msra.mxu0 0.0
    %106 = vmatprep.subr.mxu0 0.0
    %107 = vmatpush1.msra.mxu0 0.0
    %108 = vmatprep.subr.mxu0 0.0
    %109 = vmatpush1.msra.mxu0 0.0
    %110 = vmatprep.subr.mxu0 0.0
    %111 = vmatpush1.msra.mxu0 0.0
    %112 = vmatprep.subr.mxu0 0.0
    %113 = vmatpush1.msra.mxu0 0.0
    %114 = vmatprep.subr.mxu0 0.0
    %115 = vmatpush1.msra.mxu0 0.0
    %116 = vmatprep.subr.mxu0 0.0
    %117 = vmatpush1.msra.mxu0 0.0
    %118 = vmatprep.subr.mxu0 0.0
    %119 = vmatpush1.msra.mxu0 0.0
    %120 = vmatprep.subr.mxu0 0.0
    %121 = vmatpush1.msra.mxu0 0.0
    %122 = vmatprep.subr.mxu0 0.0
    %123 = vmatpush1.msra.mxu0 0.0
    %124 = vmatprep.subr.mxu0 0.0
    %125 = vmatpush1.msra.mxu0 0.0
    %126 = vmatprep.mubr.f32.mxu0 0.0
    %127 = vmatmul.mubr.f32.gmra.mrb[0].mxu0 %v57
    %v128 = vpop.f32.mrb[0].mxu0
    %v129 = vadd.f32 0.0, %v128
    %v130 = vpop.f32.mrb[0].mxu0
    %131 = vmatprep.mubr.f32.mxu0 0.0
    %132 = vmatmul.mubr.f32.gmra.mrb[0].mxu0 %v60
    %v133 = vpop.f32.mrb[0].mxu0
    %v134 = vadd.f32 0.0, %v133
    %v135 = vpop.f32.mrb[0].mxu0
    %136 = vdwg.mxu0
    %v137 = vadd.f32 %v47, %v129
    %v138 = vadd.f32 %v48, %v134
    %vm139 = vcmask 523264
    %140 = vst.msk [vmem:[#allocation2] sm:$0xff] %vm139, %v137
    %141 = vst.msk [vmem:[#allocation2 + $0x8] sm:$0xff] %vm139, %v138
    // Predicated region
    $region22: #{tpu_custom_call.1} parent=1 // pred_check
      %p142 = pneg %p40
    $region23: #{tpu_custom_call.1} parent=1 // pred_check_branch
      %144 = sbr.rel (%p142) target = $region25
    $region24: #{tpu_custom_call.1} parent=1 // pred_region
      %v145 = vld [vmem:[#allocation2] sm:$0xff]
      %v146 = vld [vmem:[#allocation2 + $0x8] sm:$0xff]
      %147 = vst.msk [vmem:[#allocation8] sm:$0xff] %vm139, %v145
      %148 = vst.msk [vmem:[#allocation8 + $0x8] sm:$0xff] %vm139, %v146
    $region25: #{tpu_custom_call.1} parent=1 // pred_fallthru
      _
    // Predicated region
    $region26: #{tpu_custom_call.1} parent=1 // pred_check
      _
    $region27: #{tpu_custom_call.1} parent=1 // pred_check_branch
      %150 = sbr.rel (0) target = $region29
    $region28: #{tpu_custom_call.1} parent=1 // pred_region
      %s152 = ssub.s32 256, 256
      %153 = vsyncadd [#allocation5], %s152
      %s154 = sshll.u32 [#allocation8], 4
      %s155 = int_to_ptr.vmem [resolvable:$true] %s154
      %160 = dma.vmem_to_hbm [thread:$0]  %s155, 256, %s2, [#allocation5], 128, 128, 8
    $region29: #{tpu_custom_call.1} parent=1 // pred_fallthru
      _
    // Predicated region
    $region30: #{tpu_custom_call.1} parent=1 // pred_check
      _
    $region31: #{tpu_custom_call.1} parent=1 // pred_check_branch
      %162 = sbr.rel (0) target = $region33
    $region32: #{tpu_custom_call.1} parent=1 // pred_region
      %163 = dma.done [#allocation5], 256
    $region33: #{tpu_custom_call.1} parent=1 // pred_fallthru
      _
    %164 = vsyncpa [#allocation4], 1
    %165 = vsyncpa [#allocation7], 1
    %166 = vsyncpa [#allocation5], 1

</llo_original>
